<compile_context>
chip_gen: v7x
topology: tpu7x:2x2x1
jax: 0.10.0
libtpu: 0.0.40
codegen_flags: <defaults>
</compile_context>

<pallas_src>
import jax
import jax.numpy as jnp
from jax import lax
from jax.experimental import pallas as pl
from jax.experimental.pallas import tpu as pltpu


def _mlp_embed_kernel(x_ref, w1_ref, b1_ref, w2_ref, b2_ref, o_ref, acc_ref):
    """One (batch-tile, K-tile) grid step of l2norm(relu(x@W1+b1) @ W2 + b2)."""
    k = pl.program_id(1)

    @pl.when(k == 0)
    def _init():
        acc_ref[...] = jnp.zeros_like(acc_ref)

    # Partial first matmul: (TM, TK) @ (TK, hidden), f32 accumulation on the MXU.
    acc_ref[...] += jnp.dot(
        x_ref[...], w1_ref[...], preferred_element_type=jnp.float32
    )

    @pl.when(k == pl.num_programs(1) - 1)
    def _finalize():
        # Bias + ReLU in f32 (v5e VPU has no bf16 VALU; epilogue math stays f32).
        h = jnp.maximum(acc_ref[...] + b1_ref[...], 0.0)
        # Second (small) matmul: MXU operands in the weight dtype, f32 accumulate.
        # (bf16 path rounds h to bf16 here -- extra rounding vs a torch f32 run.)
        y = jnp.dot(
            h.astype(w2_ref.dtype), w2_ref[...],
            preferred_element_type=jnp.float32,
        )
        y = y + b2_ref[...]
        # L2 normalize over the feature axis. No epsilon, matching the PyTorch
        # Normalize(power=2) module exactly (an all-zero row would give inf/NaN,
        # exactly as in torch). rsqrt -> EUP slot, cross-lane sum -> XLU slot.
        inv_norm = lax.rsqrt(jnp.sum(y * y, axis=1, keepdims=True))
        o_ref[...] = (y * inv_norm).astype(o_ref.dtype)


def _round_up(v, m):
    return ((v + m - 1) // m) * m


def _vmem_capacity_bytes(default=64 * 1024 * 1024):
    """Per-TensorCore VMEM capacity; conservative 64 MiB (v7x) fallback."""
    try:
        return int(pltpu.get_tpu_info().vmem_capacity_bytes)
    except Exception:
        return default


def _derive_tiling(B_pad, dim_in, hidden, dim_out, x_bytes, w_bytes, out_bytes,
                   vmem_cap):
    """Pick (TM, TK): TK by slab bytes, then TM maximized within the VMEM budget.

    Maximizing TM is the priority: total HBM traffic on the dominant W1 stream
    is ceil(B/TM) * dim_in * hidden * w_bytes, so fewer batch tiles means fewer
    W1 re-reads.  TK only amortizes the ~0.35us per-grid-step overhead, so it is
    shrunk first whenever TM is VMEM-limited.
    """
    big_vmem = vmem_cap >= 100 * 1024 * 1024           # v5e/v6e (128 MiB) vs v7x (64 MiB)
    budget = max(24 << 20, vmem_cap - (12 << 20))      # leave pipelining headroom
    slab_target = (6 << 20) if big_vmem else (3 << 20)
    tm_cap = 1024 if big_vmem else 512

    # Largest multiple-of-128 TK whose W1 slab is ~slab_target bytes.
    tk = max(128, (slab_target // (hidden * w_bytes)) // 128 * 128)
    tk = min(tk, _round_up(dim_in, 128))
    # Re-balance so the last K step isn't mostly zero padding.
    tk = _round_up(pl.cdiv(dim_in, pl.cdiv(dim_in, tk)), 128)

    best = None
    while True:
        fixed = (2 * tk * hidden * w_bytes              # W1 slabs (2 buffers)
                 + 2 * hidden * dim_out * w_bytes       # W2 (resident, 2 buffers)
                 + 2 * 8 * (hidden + dim_out) * 4)      # b1/b2 (sublane-padded)
        per_tm = 2 * tk * x_bytes + 2 * dim_out * out_bytes + hidden * 4
        tm_fit = ((budget - fixed) // per_tm // 8) * 8 if budget > fixed else 0
        tm = min(B_pad, tm_cap, tm_fit)
        if tm >= 8:
            if best is None or (tm, tk) > best:
                best = (tm, tk)
            if tm >= min(B_pad, tm_cap):
                break                                   # TM no longer budget-limited
        if tk <= 128:
            break
        tk = max(128, (tk // 2) // 128 * 128)

    if best is None:
        # Degenerate (enormous hidden): smallest tiles; the VMEM clamp in the
        # caller still requests <= capacity - headroom.
        best = (8, 128)
    return best


def mlp_embed(x_nchw, w1, b1, w2, b2, *, out_dtype=jnp.float32):
    """x_nchw: (B, C, H, W) with C*H*W == dim_in.
    w1: (dim_in, 2*dim_out), w2: (2*dim_out, dim_out)  (transposed vs torch Linear)."""
    B = x_nchw.shape[0]
    dim_in, hidden = w1.shape
    hidden2, dim_out = w2.shape
    assert hidden == hidden2, "w1/w2 inner dims must agree"

    # Flatten NCHW -> (B, dim_in) at the NATIVE dtype (no forced f32 copy).
    x2d = x_nchw.reshape(B, -1)
    assert x2d.shape[1] == dim_in, "flattened input must match w1's dim_in"

    x_bytes = jnp.dtype(x2d.dtype).itemsize
    w_bytes = jnp.dtype(w1.dtype).itemsize
    out_bytes = jnp.dtype(out_dtype).itemsize

    vmem_cap = _vmem_capacity_bytes()
    B_pad = _round_up(max(B, 8), 8)                     # (8,128)-aligned sublanes
    TM, TK = _derive_tiling(B_pad, dim_in, hidden, dim_out,
                            x_bytes, w_bytes, out_bytes, vmem_cap)

    # v7x megacore policy: splitting the batch duplicates the W1 HBM stream, so
    # only split a single batch tile in two when the kernel is compute-bound
    # (large batch + narrow <=2-byte weights); otherwise keep one large tile.
    if pl.cdiv(B_pad, TM) == 1 and B_pad >= 512 and w_bytes <= 2:
        TM = max(8, _round_up(pl.cdiv(B_pad, 2), 8))

    dim_in_pad = _round_up(dim_in, TK)

    # Zero-pad: padded W1 rows / x columns contribute nothing to the reduction
    # (exact); padded batch rows are sliced off below, so a hypothetical
    # rsqrt(0) on a padded row can never leak into valid rows.
    if (B_pad, dim_in_pad) != (B, dim_in):
        x2d = jnp.pad(x2d, ((0, B_pad - B), (0, dim_in_pad - dim_in)))
    if dim_in_pad != dim_in:
        w1 = jnp.pad(w1, ((0, dim_in_pad - dim_in), (0, 0)))

    # Biases stay f32 (tiny); the epilogue runs in f32 regardless of input dtype.
    b1_2d = b1.reshape(1, hidden).astype(jnp.float32)
    b2_2d = b2.reshape(1, dim_out).astype(jnp.float32)

    # VMEM footprint: double-buffered inputs/outputs + resident f32 accumulator.
    fixed = (2 * TK * hidden * w_bytes
             + 2 * hidden * dim_out * w_bytes
             + 2 * 8 * (hidden + dim_out) * 4)
    per_tm = 2 * TK * x_bytes + 2 * dim_out * out_bytes + hidden * 4
    footprint = fixed + TM * per_tm
    # Clamp the scoped-VMEM request to chip capacity minus headroom (v7x-safe).
    vmem_limit = int(min(vmem_cap - (8 << 20),
                         max(32 << 20, footprint + (4 << 20))))

    grid = (pl.cdiv(B_pad, TM), dim_in_pad // TK)

    out = pl.pallas_call(
        _mlp_embed_kernel,
        out_shape=jax.ShapeDtypeStruct((B_pad, dim_out), out_dtype),
        grid=grid,
        in_specs=[
            pl.BlockSpec((TM, TK), lambda i, k: (i, k)),            # x tile
            pl.BlockSpec((TK, hidden), lambda i, k: (k, 0)),        # W1 K-slab
            pl.BlockSpec((1, hidden), lambda i, k: (0, 0)),         # b1 (resident)
            pl.BlockSpec((hidden, dim_out), lambda i, k: (0, 0)),   # W2 (resident)
            pl.BlockSpec((1, dim_out), lambda i, k: (0, 0)),        # b2 (resident)
        ],
        out_specs=pl.BlockSpec((TM, dim_out), lambda i, k: (i, 0)),
        scratch_shapes=[pltpu.VMEM((TM, hidden), jnp.float32)],
        compiler_params=pltpu.CompilerParams(
            # Batch tiles are independent -> "parallel" (megacore sharding);
            # K is a reduction into the resident accumulator -> "arbitrary", last.
            dimension_semantics=("parallel", "arbitrary"),
            vmem_limit_bytes=vmem_limit,
        ),
    )(x2d, w1, b1_2d, w2, b2_2d)

    return out[:B] if B_pad != B else out


def reference(x_nchw, w1, b1, w2, b2):
    x = x_nchw.reshape(x_nchw.shape[0], -1).astype(jnp.float32)
    h = jnp.maximum(jnp.dot(x, w1.astype(jnp.float32), precision="highest") + b1, 0.0)
    y = jnp.dot(h, w2.astype(jnp.float32), precision="highest") + b2
    norm = jnp.sqrt(jnp.sum(y * y, axis=1, keepdims=True))
    return y / norm


if __name__ == "__main__":
    # Module defaults: dim_in=1024, dim_out=128.
    # Input (2, 4, 16, 16) flattens to (2, 1024), matching dim_in.
    B, C, H, W = 2, 4, 16, 16
    dim_in = C * H * W          # 1024
    dim_out = 128
    hidden = 2 * dim_out        # 256

    key = jax.random.PRNGKey(0)
    kx, k1, kb1, k2, kb2 = jax.random.split(key, 5)

    x = jax.random.normal(kx, (B, C, H, W), dtype=jnp.float32)

    # Deterministic parameter init (uniform, ~ torch Linear default scale).
    s1 = 1.0 / jnp.sqrt(dim_in)
    s2 = 1.0 / jnp.sqrt(hidden)
    w1 = jax.random.uniform(k1, (dim_in, hidden), jnp.float32, -s1, s1)
    b1 = jax.random.uniform(kb1, (hidden,), jnp.float32, -s1, s1)
    w2 = jax.random.uniform(k2, (hidden, dim_out), jnp.float32, -s2, s2)
    b2 = jax.random.uniform(kb2, (dim_out,), jnp.float32, -s2, s2)

    ref = reference(x, w1, b1, w2, b2)

    # --- f32 path: matches the PyTorch module ---
    out = jax.block_until_ready(mlp_embed(x, w1, b1, w2, b2))
    assert out.shape == (B, dim_out)
    assert bool(jnp.all(jnp.isfinite(out)))
    assert jnp.allclose(out, ref, atol=2e-3, rtol=2e-3), "f32 mismatch vs reference"

    # --- bf16 weight/activation path (halves HBM bytes; f32 accumulation) ---
    out_bf16 = jax.block_until_ready(
        mlp_embed(x.astype(jnp.bfloat16),
                  w1.astype(jnp.bfloat16), b1,
                  w2.astype(jnp.bfloat16), b2))
    assert out_bf16.shape == (B, dim_out)
    assert jnp.allclose(out_bf16, ref, atol=3e-2, rtol=3e-2), "bf16 mismatch vs reference"

    print("KERNEL_OK")
</pallas_src>

<mosaic_0001>
module attributes {stable_mosaic.version = 11 : i64} {
  func.func @_mlp_embed_kernel(%arg0: i32, %arg1: i32, %arg2: memref<8x1024xf32, #tpu.memory_space<vmem>>, %arg3: memref<1024x256xf32, #tpu.memory_space<vmem>>, %arg4: memref<1x256xf32, #tpu.memory_space<vmem>>, %arg5: memref<256x128xf32, #tpu.memory_space<vmem>>, %arg6: memref<1x128xf32, #tpu.memory_space<vmem>>, %arg7: memref<8x128xf32, #tpu.memory_space<vmem>>, %arg8: memref<8x256xf32, #tpu.memory_space<vmem>>) attributes {dimension_semantics = [#tpu.dimension_semantics<parallel>, #tpu.dimension_semantics<arbitrary>], iteration_bounds = array<i64: 1, 1>, scalar_prefetch = 0 : i64, scratch_operands = 1 : i64, tpu.core_type = #tpu.core_type<tc>, window_params = [{transform_indices = @transform_0, window_bounds = array<i64: 8, 1024>}, {transform_indices = @transform_1, window_bounds = array<i64: 1024, 256>}, {pipeline_mode = #tpu.pipeline_mode<synchronous>, transform_indices = @transform_2, window_bounds = array<i64: 1, 256>}, {pipeline_mode = #tpu.pipeline_mode<synchronous>, transform_indices = @transform_3, window_bounds = array<i64: 256, 128>}, {pipeline_mode = #tpu.pipeline_mode<synchronous>, transform_indices = @transform_4, window_bounds = array<i64: 1, 128>}, {transform_indices = @transform_5, window_bounds = array<i64: 8, 128>}]} {
    %c0_i32 = arith.constant 0 : i32
    %0 = arith.cmpi eq, %arg1, %c0_i32 : i32
    %1 = arith.extui %0 : i1 to i32
    %c0_i32_0 = arith.constant 0 : i32
    %2 = arith.cmpi ne, %1, %c0_i32_0 : i32
    scf.if %2 {
      %cst_10 = arith.constant 0.000000e+00 : f32
      %12 = vector.broadcast %cst_10 : f32 to vector<8x256xf32>
      %c0_11 = arith.constant 0 : index
      %c0_12 = arith.constant 0 : index
      %13 = vector.load %arg8[%c0_11, %c0_12] : memref<8x256xf32, #tpu.memory_space<vmem>>, vector<8x256xf32>
      tpu.vector_store %arg8[%c0_11, %c0_12], %12 {strides = array<i32>} : memref<8x256xf32, #tpu.memory_space<vmem>>, vector<8x256xf32>,
    } else {
    }
    %c0 = arith.constant 0 : index
    %c0_1 = arith.constant 0 : index
    %3 = vector.load %arg8[%c0, %c0_1] : memref<8x256xf32, #tpu.memory_space<vmem>>, vector<8x256xf32>
    %c0_2 = arith.constant 0 : index
    %c0_3 = arith.constant 0 : index
    %4 = vector.load %arg2[%c0_2, %c0_3] : memref<8x1024xf32, #tpu.memory_space<vmem>>, vector<8x1024xf32>
    %c0_4 = arith.constant 0 : index
    %c0_5 = arith.constant 0 : index
    %5 = vector.load %arg3[%c0_4, %c0_5] : memref<1024x256xf32, #tpu.memory_space<vmem>>, vector<1024x256xf32>
    %cst = arith.constant dense<0.000000e+00> : vector<8x256xf32>
    %6 = tpu.matmul %4, %5, %cst {dimension_numbers = #tpu.dot_dimension_numbers<[1], [0], [0], [1], [0, 0, 1, 1], [], []>} : vector<8x1024xf32>, vector<1024x256xf32>, vector<8x256xf32> -> vector<8x256xf32>
    %7 = arith.addf %3, %6 : vector<8x256xf32>
    %c0_6 = arith.constant 0 : index
    %c0_7 = arith.constant 0 : index
    %8 = vector.load %arg8[%c0_6, %c0_7] : memref<8x256xf32, #tpu.memory_space<vmem>>, vector<8x256xf32>
    tpu.vector_store %arg8[%c0_6, %c0_7], %7 {strides = array<i32>} : memref<8x256xf32, #tpu.memory_space<vmem>>, vector<8x256xf32>,
    %c0_i32_8 = arith.constant 0 : i32
    %9 = arith.cmpi eq, %arg1, %c0_i32_8 : i32
    %10 = arith.extui %9 : i1 to i32
    %c0_i32_9 = arith.constant 0 : i32
    %11 = arith.cmpi ne, %10, %c0_i32_9 : i32
    scf.if %11 {
      %c0_10 = arith.constant 0 : index
      %c0_11 = arith.constant 0 : index
      %12 = vector.load %arg8[%c0_10, %c0_11] : memref<8x256xf32, #tpu.memory_space<vmem>>, vector<8x256xf32>
      %c0_12 = arith.constant 0 : index
      %c0_13 = arith.constant 0 : index
      %13 = vector.load %arg4[%c0_12, %c0_13] : memref<1x256xf32, #tpu.memory_space<vmem>>, vector<1x256xf32>
      %14 = vector.broadcast %13 : vector<1x256xf32> to vector<8x256xf32>
      %15 = arith.addf %12, %14 : vector<8x256xf32>
      %cst_14 = arith.constant 0.000000e+00 : f32
      %16 = vector.broadcast %cst_14 : f32 to vector<8x256xf32>
      %17 = arith.maximumf %15, %16 : vector<8x256xf32>
      %c0_15 = arith.constant 0 : index
      %c0_16 = arith.constant 0 : index
      %18 = vector.load %arg5[%c0_15, %c0_16] : memref<256x128xf32, #tpu.memory_space<vmem>>, vector<256x128xf32>
      %cst_17 = arith.constant dense<0.000000e+00> : vector<8x128xf32>
      %19 = tpu.matmul %17, %18, %cst_17 {dimension_numbers = #tpu.dot_dimension_numbers<[1], [0], [0], [1], [0, 0, 1, 1], [], []>} : vector<8x256xf32>, vector<256x128xf32>, vector<8x128xf32> -> vector<8x128xf32>
      %c0_18 = arith.constant 0 : index
      %c0_19 = arith.constant 0 : index
      %20 = vector.load %arg6[%c0_18, %c0_19] : memref<1x128xf32, #tpu.memory_space<vmem>>, vector<1x128xf32>
      %21 = vector.broadcast %20 : vector<1x128xf32> to vector<8x128xf32>
      %22 = arith.addf %19, %21 : vector<8x128xf32>
      %23 = arith.mulf %22, %22 : vector<8x128xf32>
      %cst_20 = arith.constant dense<0.000000e+00> : vector<8xf32>
      %24 = vector.multi_reduction <add>, %23, %cst_20 [1] : vector<8x128xf32> to vector<8xf32>
      %25 = vector.shape_cast %24 : vector<8xf32> to vector<8x1xf32>
      %26 = math.rsqrt %25 : vector<8x1xf32>
      %27 = vector.broadcast %26 : vector<8x1xf32> to vector<8x128xf32>
      %28 = arith.mulf %22, %27 : vector<8x128xf32>
      %c0_21 = arith.constant 0 : index
      %c0_22 = arith.constant 0 : index
      %29 = vector.load %arg7[%c0_21, %c0_22] : memref<8x128xf32, #tpu.memory_space<vmem>>, vector<8x128xf32>
      tpu.vector_store %arg7[%c0_21, %c0_22], %28 {strides = array<i32>} : memref<8x128xf32, #tpu.memory_space<vmem>>, vector<8x128xf32>,
    } else {
    }
    return
  }
  func.func @transform_0(%arg0: i32, %arg1: i32) -> (i32, i32) {
    %c0_i32 = arith.constant 0 : i32
    return %arg0, %arg1 : i32, i32
  }
  func.func @transform_1(%arg0: i32, %arg1: i32) -> (i32, i32) {
    %c0_i32 = arith.constant 0 : i32
    %c0_i32_0 = arith.constant 0 : i32
    return %arg1, %c0_i32 : i32, i32
  }
  func.func @transform_2(%arg0: i32, %arg1: i32) -> (i32, i32) {
    %c0_i32 = arith.constant 0 : i32
    %c0_i32_0 = arith.constant 0 : i32
    %c0_i32_1 = arith.constant 0 : i32
    return %c0_i32, %c0_i32_0 : i32, i32
  }
  func.func @transform_3(%arg0: i32, %arg1: i32) -> (i32, i32) {
    %c0_i32 = arith.constant 0 : i32
    %c0_i32_0 = arith.constant 0 : i32
    %c0_i32_1 = arith.constant 0 : i32
    return %c0_i32, %c0_i32_0 : i32, i32
  }
  func.func @transform_4(%arg0: i32, %arg1: i32) -> (i32, i32) {
    %c0_i32 = arith.constant 0 : i32
    %c0_i32_0 = arith.constant 0 : i32
    %c0_i32_1 = arith.constant 0 : i32
    return %c0_i32, %c0_i32_0 : i32, i32
  }
  func.func @transform_5(%arg0: i32, %arg1: i32) -> (i32, i32) {
    %c0_i32 = arith.constant 0 : i32
    %c0_i32_0 = arith.constant 0 : i32
    return %arg0, %c0_i32 : i32, i32
  }
}

</mosaic_0001>

<llo_original>
// kernel: tpu_custom_call.1
$region0: #{tpu_custom_call.1}
  #allocation0 [shape = 'u32[]', space=smem, size = 0x4, offset = 0x4, fixed_abs, tag = 'smem constant byte address 0x4 - core index']
  #allocation1 [shape = 'u32[144,128]{1,0:T(1,128)}', space=vmem, size = 0x12000, scoped, tag = 'internal scratch']
  #allocation2 [shape = 'f32[8,256]{1,0:T(8,128)}', space=vmem, size = 0x2000, scoped, tag = 'scratch operand']
  %s0 = inlined_call_operand.hbm [shape: f32[8,1024], index: 0, kind: input, shape index: {}]
  %s1 = inlined_call_operand.hbm [shape: f32[1024,256], index: 1, kind: input, shape index: {}]
  %s2 = inlined_call_operand.vmem [shape: f32[1,256], index: 2, kind: input, shape index: {}]
  %s3 = inlined_call_operand.hbm [shape: f32[256,128], index: 3, kind: input, shape index: {}]
  %s4 = inlined_call_operand.vmem [shape: f32[1,128], index: 4, kind: input, shape index: {}]
  %s5 = inlined_call_operand.hbm [shape: f32[8,128], index: 5, kind: output, shape index: {}]
  %s6 = sld [smem:[#allocation0]]
  $region50: #{tpu_custom_call.1} parent=0
    _
  %s8 = ssub.s32 1, %s6
  %s9 = scalar_select 0, %s8, %s6
  $region1: #{tpu_custom_call.1} parent=0
    #allocation3 [shape = 'u8[32768]{0}', space=vmem, size = 0x8000, scoped, tag = 'input window, operand 0, single buffered']
    #allocation4 [shape = 's32[1]{0}', space=sflag, size = 0x4, scoped, tag = 'scoped memory for tpu_custom_call.1']
    #allocation5 [shape = 's32[1]{0}', space=sflag, size = 0x4, scoped, tag = 'scoped memory for tpu_custom_call.1']
    #allocation6 [shape = 'u8[1048576]{0}', space=vmem, size = 0x100000, scoped, tag = 'input window, operand 1, single buffered']
    #allocation7 [shape = 's32[1]{0}', space=sflag, size = 0x4, scoped, tag = 'scoped memory for tpu_custom_call.1']
    #allocation8 [shape = 'u8[131072]{0}', space=vmem, size = 0x20000, scoped, tag = 'input window, operand 3, single buffered']
    #allocation9 [shape = 'u8[4096]{0}', space=vmem, size = 0x1000, scoped, tag = 'output window, operand 0, single buffered']
    %10 = vsyncpa [#allocation4], 0
    %11 = vsyncpa [#allocation7], 0
    %12 = vsyncpa [#allocation5], 0
    // Predicated region
    $region2: #{tpu_custom_call.1} parent=1 // pred_check
      _
    $region3: #{tpu_custom_call.1} parent=1 // pred_check_branch
      %14 = sbr.rel (0) target = $region5
    $region4: #{tpu_custom_call.1} parent=1 // pred_region
      %s16 = ssub.s32 1024, 1024
      %17 = vsyncadd [#allocation4], %s16
      %s19 = sshll.u32 [#allocation3], 4
      %s20 = int_to_ptr.vmem [resolvable:$true] %s19
      %22 = dma.hbm_to_vmem [thread:$0]  %s0, 1024, %s20, [#allocation4]
    $region5: #{tpu_custom_call.1} parent=1 // pred_fallthru
      _
    // Predicated region
    $region6: #{tpu_custom_call.1} parent=1 // pred_check
      _
    $region7: #{tpu_custom_call.1} parent=1 // pred_check_branch
      %24 = sbr.rel (0) target = $region9
    $region8: #{tpu_custom_call.1} parent=1 // pred_region
      %s26 = ssub.s32 32768, 32768
      %27 = vsyncadd [#allocation7], %s26
      %s28 = sshll.u32 [#allocation6], 4
      %s29 = int_to_ptr.vmem [resolvable:$true] %s28
      %34 = dma.hbm_to_vmem [thread:$0]  %s1, 32768, %s29, [#allocation7], 256, 256, 16
    $region9: #{tpu_custom_call.1} parent=1 // pred_fallthru
      _
    // Predicated region
    $region10: #{tpu_custom_call.1} parent=1 // pred_check
      _
    $region11: #{tpu_custom_call.1} parent=1 // pred_check_branch
      %36 = sbr.rel (0) target = $region13
    $region12: #{tpu_custom_call.1} parent=1 // pred_region
      _
    $region13: #{tpu_custom_call.1} parent=1 // pred_fallthru
      _
    // Predicated region
    $region14: #{tpu_custom_call.1} parent=1 // pred_check
      _
    $region15: #{tpu_custom_call.1} parent=1 // pred_check_branch
      %38 = sbr.rel (0) target = $region17
    $region16: #{tpu_custom_call.1} parent=1 // pred_region
      %s40 = ssub.s32 4096, 4096
      %41 = vsyncadd [#allocation7], %s40
      %s42 = sshll.u32 [#allocation8], 4
      %s43 = int_to_ptr.vmem [resolvable:$true] %s42
      %48 = dma.hbm_to_vmem [thread:$0]  %s3, 4096, %s43, [#allocation7], 128, 128, 8
    $region17: #{tpu_custom_call.1} parent=1 // pred_fallthru
      _
    // Predicated region
    $region18: #{tpu_custom_call.1} parent=1 // pred_check
      _
    $region19: #{tpu_custom_call.1} parent=1 // pred_check_branch
      %50 = sbr.rel (0) target = $region21
    $region20: #{tpu_custom_call.1} parent=1 // pred_region
      _
    $region21: #{tpu_custom_call.1} parent=1 // pred_fallthru
      _
    // Predicated region
    $region22: #{tpu_custom_call.1} parent=1 // pred_check
      _
    $region23: #{tpu_custom_call.1} parent=1 // pred_check_branch
      %52 = sbr.rel (0) target = $region25
    $region24: #{tpu_custom_call.1} parent=1 // pred_region
      %53 = dma.done [#allocation4], 1024
    $region25: #{tpu_custom_call.1} parent=1 // pred_fallthru
      _
    // Predicated region
    $region26: #{tpu_custom_call.1} parent=1 // pred_check
      _
    $region27: #{tpu_custom_call.1} parent=1 // pred_check_branch
      %55 = sbr.rel (0) target = $region29
    $region28: #{tpu_custom_call.1} parent=1 // pred_region
      %56 = dma.done [#allocation7], 32768
    $region29: #{tpu_custom_call.1} parent=1 // pred_fallthru
      _
    // Predicated region
    $region30: #{tpu_custom_call.1} parent=1 // pred_check
      _
    $region31: #{tpu_custom_call.1} parent=1 // pred_check_branch
      %58 = sbr.rel (0) target = $region33
    $region32: #{tpu_custom_call.1} parent=1 // pred_region
      %59 = dma.done [#allocation7], 4096
    $region33: #{tpu_custom_call.1} parent=1 // pred_fallthru
      _
    %p60 = scmp.eq.s32.totalorder 0, 0
    // Predicated region
    $region34: #{tpu_custom_call.1} parent=1 // pred_check
      %p61 = pneg %p60
    $region35: #{tpu_custom_call.1} parent=1 // pred_check_branch
      %63 = sbr.rel (%p61) target = $region37
    $region36: #{tpu_custom_call.1} parent=1 // pred_region
      %64 = vst [vmem:[#allocation2] sm:$0xff] 0.0
      %65 = vst [vmem:[#allocation2 + $0x8] sm:$0xff] 0.0
    $region37: #{tpu_custom_call.1} parent=1 // pred_fallthru
      _
    %v66 = vld [vmem:[#allocation2] sm:$0xff]
    %v67 = vld [vmem:[#allocation2 + $0x8] sm:$0xff]
    %v68 = vld [vmem:[#allocation3] sm:$0xff]
    %v69 = vld [vmem:[#allocation3 + $0x8] sm:$0xff]
    %v70 = vld [vmem:[#allocation3 + $0x10] sm:$0xff]
    %v71 = vld [vmem:[#allocation3 + $0x18] sm:$0xff]
    %v72 = vld [vmem:[#allocation3 + $0x20] sm:$0xff]
    %v73 = vld [vmem:[#allocation3 + $0x28] sm:$0xff]
    %v74 = vld [vmem:[#allocation3 + $0x30] sm:$0xff]
    %v75 = vld [vmem:[#allocation3 + $0x38] sm:$0xff]
    %v76 = vld [vmem:[#allocation6] sm:$0xff]
    %v77 = vld [vmem:[#allocation6 + $0x8] sm:$0xff]
    %v78 = vld [vmem:[#allocation6 + $0x10] sm:$0xff]
    %v79 = vld [vmem:[#allocation6 + $0x18] sm:$0xff]
    %v80 = vld [vmem:[#allocation6 + $0x20] sm:$0xff]
    %v81 = vld [vmem:[#allocation6 + $0x28] sm:$0xff]
    %v82 = vld [vmem:[#allocation6 + $0x30] sm:$0xff]
    %v83 = vld [vmem:[#allocation6 + $0x38] sm:$0xff]
    %v84 = vld [vmem:[#allocation6 + $0x40] sm:$0xff]
    %v85 = vld [vmem:[#allocation6 + $0x48] sm:$0xff]
    %v86 = vld [vmem:[#allocation6 + $0x50] sm:$0xff]
    %v87 = vld [vmem:[#allocation6 + $0x58] sm:$0xff]
    %v88 = vld [vmem:[#allocation6 + $0x60] sm:$0xff]
    %v89 = vld [vmem:[#allocation6 + $0x68] sm:$0xff]
    %v90 = vld [vmem:[#allocation6 + $0x70] sm:$0xff]
    %v91 = vld [vmem:[#allocation6 + $0x78] sm:$0xff]
    %v92 = vld [vmem:[#allocation6 + $0x80] sm:$0xff]
    %v93 = vld [vmem:[#allocation6 + $0x88] sm:$0xff]
    %v94 = vld [vmem:[#allocation6 + $0x90] sm:$0xff]
    %v95 = vld [vmem:[#allocation6 + $0x98] sm:$0xff]
    %v96 = vld [vmem:[#allocation6 + $0xa0] sm:$0xff]
    %v97 = vld [vmem:[#allocation6 + $0xa8] sm:$0xff]
    %v98 = vld [vmem:[#allocation6 + $0xb0] sm:$0xff]
    %v99 = vld [vmem:[#allocation6 + $0xb8] sm:$0xff]
    %v100 = vld [vmem:[#allocation6 + $0xc0] sm:$0xff]
    %v101 = vld [vmem:[#allocation6 + $0xc8] sm:$0xff]
    %v102 = vld [vmem:[#allocation6 + $0xd0] sm:$0xff]
    %v103 = vld [vmem:[#allocation6 + $0xd8] sm:$0xff]
    %v104 = vld [vmem:[#allocation6 + $0xe0] sm:$0xff]
    %v105 = vld [vmem:[#allocation6 + $0xe8] sm:$0xff]
    %v106 = vld [vmem:[#allocation6 + $0xf0] sm:$0xff]
    %v107 = vld [vmem:[#allocation6 + $0xf8] sm:$0xff]
    %v108 = vld [vmem:[#allocation6 + $0x100] sm:$0xff]
    %v109 = vld [vmem:[#allocation6 + $0x108] sm:$0xff]
    %v110 = vld [vmem:[#allocation6 + $0x110] sm:$0xff]
    %v111 = vld [vmem:[#allocation6 + $0x118] sm:$0xff]
    %v112 = vld [vmem:[#allocation6 + $0x120] sm:$0xff]
    %v113 = vld [vmem:[#allocation6 + $0x128] sm:$0xff]
    %v114 = vld [vmem:[#allocation6 + $0x130] sm:$0xff]
    %v115 = vld [vmem:[#allocation6 + $0x138] sm:$0xff]
    %v116 = vld [vmem:[#allocation6 + $0x140] sm:$0xff]
    %v117 = vld [vmem:[#allocation6 + $0x148] sm:$0xff]
    %v118 = vld [vmem:[#allocation6 + $0x150] sm:$0xff]
    %v119 = vld [vmem:[#allocation6 + $0x158] sm:$0xff]
    %v120 = vld [vmem:[#allocation6 + $0x160] sm:$0xff]
    %v121 = vld [vmem:[#allocation6 + $0x168] sm:$0xff]
    %v122 = vld [vmem:[#allocation6 + $0x170] sm:$0xff]
    %v123 = vld [vmem:[#allocation6 + $0x178] sm:$0xff]
    %v124 = vld [vmem:[#allocation6 + $0x180] sm:$0xff]
    %v125 = vld [vmem:[#allocation6 + $0x188] sm:$0xff]
    %v126 = vld [vmem:[#allocation6 + $0x190] sm:$0xff]
    %v127 = vld [vmem:[#allocation6 + $0x198] sm:$0xff]
    %v128 = vld [vmem:[#allocation6 + $0x1a0] sm:$0xff]
    %v129 = vld [vmem:[#allocation6 + $0x1a8] sm:$0xff]
    %v130 = vld [vmem:[#allocation6 + $0x1b0] sm:$0xff]
    %v131 = vld [vmem:[#allocation6 + $0x1b8] sm:$0xff]
    %v132 = vld [vmem:[#allocation6 + $0x1c0] sm:$0xff]
    %v133 = vld [vmem:[#allocation6 + $0x1c8] sm:$0xff]
    %v134 = vld [vmem:[#allocation6 + $0x1d0] sm:$0xff]
    %v135 = vld [vmem:[#allocation6 + $0x1d8] sm:$0xff]
    %v136 = vld [vmem:[#allocation6 + $0x1e0] sm:$0xff]
    %v137 = vld [vmem:[#allocation6 + $0x1e8] sm:$0xff]
    %v138 = vld [vmem:[#allocation6 + $0x1f0] sm:$0xff]
    %v139 = vld [vmem:[#allocation6 + $0x1f8] sm:$0xff]
    %v140 = vld [vmem:[#allocation6 + $0x200] sm:$0xff]
    %v141 = vld [vmem:[#allocation6 + $0x208] sm:$0xff]
    %v142 = vld [vmem:[#allocation6 + $0x210] sm:$0xff]
    %v143 = vld [vmem:[#allocation6 + $0x218] sm:$0xff]
    %v144 = vld [vmem:[#allocation6 + $0x220] sm:$0xff]
    %v145 = vld [vmem:[#allocation6 + $0x228] sm:$0xff]
    %v146 = vld [vmem:[#allocation6 + $0x230] sm:$0xff]
    %v147 = vld [vmem:[#allocation6 + $0x238] sm:$0xff]
    %v148 = vld [vmem:[#allocation6 + $0x240] sm:$0xff]
    %v149 = vld [vmem:[#allocation6 + $0x248] sm:$0xff]
    %v150 = vld [vmem:[#allocation6 + $0x250] sm:$0xff]
    %v151 = vld [vmem:[#allocation6 + $0x258] sm:$0xff]
    %v152 = vld [vmem:[#allocation6 + $0x260] sm:$0xff]
    %v153 = vld [vmem:[#allocation6 + $0x268] sm:$0xff]
    %v154 = vld [vmem:[#allocation6 + $0x270] sm:$0xff]
    %v155 = vld [vmem:[#allocation6 + $0x278] sm:$0xff]
    %v156 = vld [vmem:[#allocation6 + $0x280] sm:$0xff]
    %v157 = vld [vmem:[#allocation6 + $0x288] sm:$0xff]
    %v158 = vld [vmem:[#allocation6 + $0x290] sm:$0xff]
    %v159 = vld [vmem:[#allocation6 + $0x298] sm:$0xff]
    %v160 = vld [vmem:[#allocation6 + $0x2a0] sm:$0xff]
    %v161 = vld [vmem:[#allocation6 + $0x2a8] sm:$0xff]
    %v162 = vld [vmem:[#allocation6 + $0x2b0] sm:$0xff]
    %v163 = vld [vmem:[#allocation6 + $0x2b8] sm:$0xff]
    %v164 = vld [vmem:[#allocation6 + $0x2c0] sm:$0xff]
    %v165 = vld [vmem:[#allocation6 + $0x2c8] sm:$0xff]
    %v166 = vld [vmem:[#allocation6 + $0x2d0] sm:$0xff]
    %v167 = vld [vmem:[#allocation6 + $0x2d8] sm:$0xff]
    %v168 = vld [vmem:[#allocation6 + $0x2e0] sm:$0xff]
    %v169 = vld [vmem:[#allocation6 + $0x2e8] sm:$0xff]
    %v170 = vld [vmem:[#allocation6 + $0x2f0] sm:$0xff]
    %v171 = vld [vmem:[#allocation6 + $0x2f8] sm:$0xff]
    %v172 = vld [vmem:[#allocation6 + $0x300] sm:$0xff]
    %v173 = vld [vmem:[#allocation6 + $0x308] sm:$0xff]
    %v174 = vld [vmem:[#allocation6 + $0x310] sm:$0xff]
    %v175 = vld [vmem:[#allocation6 + $0x318] sm:$0xff]
    %v176 = vld [vmem:[#allocation6 + $0x320] sm:$0xff]
    %v177 = vld [vmem:[#allocation6 + $0x328] sm:$0xff]
    %v178 = vld [vmem:[#allocation6 + $0x330] sm:$0xff]
    %v179 = vld [vmem:[#allocation6 + $0x338] sm:$0xff]
    %v180 = vld [vmem:[#allocation6 + $0x340] sm:$0xff]
    %v181 = vld [vmem:[#allocation6 + $0x348] sm:$0xff]
    %v182 = vld [vmem:[#allocation6 + $0x350] sm:$0xff]
    %v183 = vld [vmem:[#allocation6 + $0x358] sm:$0xff]
    %v184 = vld [vmem:[#allocation6 + $0x360] sm:$0xff]
    %v185 = vld [vmem:[#allocation6 + $0x368] sm:$0xff]
    %v186 = vld [vmem:[#allocation6 + $0x370] sm:$0xff]
    %v187 = vld [vmem:[#allocation6 + $0x378] sm:$0xff]
    %v188 = vld [vmem:[#allocation6 + $0x380] sm:$0xff]
    %v189 = vld [vmem:[#allocation6 + $0x388] sm:$0xff]
    %v190 = vld [vmem:[#allocation6 + $0x390] sm:$0xff]
    %v191 = vld [vmem:[#allocation6 + $0x398] sm:$0xff]
    %v192 = vld [vmem:[#allocation6 + $0x3a0] sm:$0xff]
    %v193 = vld [vmem:[#allocation6 + $0x3a8] sm:$0xff]
    %v194 = vld [vmem:[#allocation6 + $0x3b0] sm:$0xff]
    %v195 = vld [vmem:[#allocation6 + $0x3b8] sm:$0xff]
    %v196 = vld [vmem:[#allocation6 + $0x3c0] sm:$0xff]
    %v197 = vld [vmem:[#allocation6 + $0x3c8] sm:$0xff]
    %v198 = vld [vmem:[#allocation6 + $0x3d0] sm:$0xff]
    %v199 = vld [vmem:[#allocation6 + $0x3d8] sm:$0xff]
    %v200 = vld [vmem:[#allocation6 + $0x3e0] sm:$0xff]
    %v201 = vld [vmem:[#allocation6 + $0x3e8] sm:$0xff]
    %v202 = vld [vmem:[#allocation6 + $0x3f0] sm:$0xff]
    %v203 = vld [vmem:[#allocation6 + $0x3f8] sm:$0xff]
    %v204 = vld [vmem:[#allocation6 + $0x400] sm:$0xff]
    %v205 = vld [vmem:[#allocation6 + $0x408] sm:$0xff]
    %v206 = vld [vmem:[#allocation6 + $0x410] sm:$0xff]
    %v207 = vld [vmem:[#allocation6 + $0x418] sm:$0xff]
    %v208 = vld [vmem:[#allocation6 + $0x420] sm:$0xff]
    %v209 = vld [vmem:[#allocation6 + $0x428] sm:$0xff]
    %v210 = vld [vmem:[#allocation6 + $0x430] sm:$0xff]
    %v211 = vld [vmem:[#allocation6 + $0x438] sm:$0xff]
    %v212 = vld [vmem:[#allocation6 + $0x440] sm:$0xff]
    %v213 = vld [vmem:[#allocation6 + $0x448] sm:$0xff]
    %v214 = vld [vmem:[#allocation6 + $0x450] sm:$0xff]
    %v215 = vld [vmem:[#allocation6 + $0x458] sm:$0xff]
    %v216 = vld [vmem:[#allocation6 + $0x460] sm:$0xff]
    %v217 = vld [vmem:[#allocation6 + $0x468] sm:$0xff]
    %v218 = vld [vmem:[#allocation6 + $0x470] sm:$0xff]
    %v219 = vld [vmem:[#allocation6 + $0x478] sm:$0xff]
    %v220 = vld [vmem:[#allocation6 + $0x480] sm:$0xff]
    %v221 = vld [vmem:[#allocation6 + $0x488] sm:$0xff]
    %v222 = vld [vmem:[#allocation6 + $0x490] sm:$0xff]
    %v223 = vld [vmem:[#allocation6 + $0x498] sm:$0xff]
    %v224 = vld [vmem:[#allocation6 + $0x4a0] sm:$0xff]
    %v225 = vld [vmem:[#allocation6 + $0x4a8] sm:$0xff]
    %v226 = vld [vmem:[#allocation6 + $0x4b0] sm:$0xff]
    %v227 = vld [vmem:[#allocation6 + $0x4b8] sm:$0xff]
    %v228 = vld [vmem:[#allocation6 + $0x4c0] sm:$0xff]
    %v229 = vld [vmem:[#allocation6 + $0x4c8] sm:$0xff]
    %v230 = vld [vmem:[#allocation6 + $0x4d0] sm:$0xff]
    %v231 = vld [vmem:[#allocation6 + $0x4d8] sm:$0xff]
    %v232 = vld [vmem:[#allocation6 + $0x4e0] sm:$0xff]
    %v233 = vld [vmem:[#allocation6 + $0x4e8] sm:$0xff]
    %v234 = vld [vmem:[#allocation6 + $0x4f0] sm:$0xff]
    %v235 = vld [vmem:[#allocation6 + $0x4f8] sm:$0xff]
    %v236 = vld [vmem:[#allocation6 + $0x500] sm:$0xff]
    %v237 = vld [vmem:[#allocation6 + $0x508] sm:$0xff]
    %v238 = vld [vmem:[#allocation6 + $0x510] sm:$0xff]
    %v239 = vld [vmem:[#allocation6 + $0x518] sm:$0xff]
    %v240 = vld [vmem:[#allocation6 + $0x520] sm:$0xff]
    %v241 = vld [vmem:[#allocation6 + $0x528] sm:$0xff]
    %v242 = vld [vmem:[#allocation6 + $0x530] sm:$0xff]
    %v243 = vld [vmem:[#allocation6 + $0x538] sm:$0xff]
    %v244 = vld [vmem:[#allocation6 + $0x540] sm:$0xff]
    %v245 = vld [vmem:[#allocation6 + $0x548] sm:$0xff]
    %v246 = vld [vmem:[#allocation6 + $0x550] sm:$0xff]
    %v247 = vld [vmem:[#allocation6 + $0x558] sm:$0xff]
    %v248 = vld [vmem:[#allocation6 + $0x560] sm:$0xff]
    %v249 = vld [vmem:[#allocation6 + $0x568] sm:$0xff]
    %v250 = vld [vmem:[#allocation6 + $0x570] sm:$0xff]
    %v251 = vld [vmem:[#allocation6 + $0x578] sm:$0xff]
    %v252 = vld [vmem:[#allocation6 + $0x580] sm:$0xff]
    %v253 = vld [vmem:[#allocation6 + $0x588] sm:$0xff]
    %v254 = vld [vmem:[#allocation6 + $0x590] sm:$0xff]
    %v255 = vld [vmem:[#allocation6 + $0x598] sm:$0xff]
    %v256 = vld [vmem:[#allocation6 + $0x5a0] sm:$0xff]
    %v257 = vld [vmem:[#allocation6 + $0x5a8] sm:$0xff]
    %v258 = vld [vmem:[#allocation6 + $0x5b0] sm:$0xff]
    %v259 = vld [vmem:[#allocation6 + $0x5b8] sm:$0xff]
    %v260 = vld [vmem:[#allocation6 + $0x5c0] sm:$0xff]
    %v261 = vld [vmem:[#allocation6 + $0x5c8] sm:$0xff]
    %v262 = vld [vmem:[#allocation6 + $0x5d0] sm:$0xff]
    %v263 = vld [vmem:[#allocation6 + $0x5d8] sm:$0xff]
    %v264 = vld [vmem:[#allocation6 + $0x5e0] sm:$0xff]
    %v265 = vld [vmem:[#allocation6 + $0x5e8] sm:$0xff]
    %v266 = vld [vmem:[#allocation6 + $0x5f0] sm:$0xff]
    %v267 = vld [vmem:[#allocation6 + $0x5f8] sm:$0xff]
    %v268 = vld [vmem:[#allocation6 + $0x600] sm:$0xff]
    %v269 = vld [vmem:[#allocation6 + $0x608] sm:$0xff]
    %v270 = vld [vmem:[#allocation6 + $0x610] sm:$0xff]
    %v271 = vld [vmem:[#allocation6 + $0x618] sm:$0xff]
    %v272 = vld [vmem:[#allocation6 + $0x620] sm:$0xff]
    %v273 = vld [vmem:[#allocation6 + $0x628] sm:$0xff]
    %v274 = vld [vmem:[#allocation6 + $0x630] sm:$0xff]
    %v275 = vld [vmem:[#allocation6 + $0x638] sm:$0xff]
    %v276 = vld [vmem:[#allocation6 + $0x640] sm:$0xff]
    %v277 = vld [vmem:[#allocation6 + $0x648] sm:$0xff]
    %v278 = vld [vmem:[#allocation6 + $0x650] sm:$0xff]
    %v279 = vld [vmem:[#allocation6 + $0x658] sm:$0xff]
    %v280 = vld [vmem:[#allocation6 + $0x660] sm:$0xff]
    %v281 = vld [vmem:[#allocation6 + $0x668] sm:$0xff]
    %v282 = vld [vmem:[#allocation6 + $0x670] sm:$0xff]
    %v283 = vld [vmem:[#allocation6 + $0x678] sm:$0xff]
    %v284 = vld [vmem:[#allocation6 + $0x680] sm:$0xff]
    %v285 = vld [vmem:[#allocation6 + $0x688] sm:$0xff]
    %v286 = vld [vmem:[#allocation6 + $0x690] sm:$0xff]
    %v287 = vld [vmem:[#allocation6 + $0x698] sm:$0xff]
    %v288 = vld [vmem:[#allocation6 + $0x6a0] sm:$0xff]
    %v289 = vld [vmem:[#allocation6 + $0x6a8] sm:$0xff]
    %v290 = vld [vmem:[#allocation6 + $0x6b0] sm:$0xff]
    %v291 = vld [vmem:[#allocation6 + $0x6b8] sm:$0xff]
    %v292 = vld [vmem:[#allocation6 + $0x6c0] sm:$0xff]
    %v293 = vld [vmem:[#allocation6 + $0x6c8] sm:$0xff]
    %v294 = vld [vmem:[#allocation6 + $0x6d0] sm:$0xff]
    %v295 = vld [vmem:[#allocation6 + $0x6d8] sm:$0xff]
    %v296 = vld [vmem:[#allocation6 + $0x6e0] sm:$0xff]
    %v297 = vld [vmem:[#allocation6 + $0x6e8] sm:$0xff]
    %v298 = vld [vmem:[#allocation6 + $0x6f0] sm:$0xff]
    %v299 = vld [vmem:[#allocation6 + $0x6f8] sm:$0xff]
    %v300 = vld [vmem:[#allocation6 + $0x700] sm:$0xff]
    %v301 = vld [vmem:[#allocation6 + $0x708] sm:$0xff]
    %v302 = vld [vmem:[#allocation6 + $0x710] sm:$0xff]
    %v303 = vld [vmem:[#allocation6 + $0x718] sm:$0xff]
    %v304 = vld [vmem:[#allocation6 + $0x720] sm:$0xff]
    %v305 = vld [vmem:[#allocation6 + $0x728] sm:$0xff]
    %v306 = vld [vmem:[#allocation6 + $0x730] sm:$0xff]
    %v307 = vld [vmem:[#allocation6 + $0x738] sm:$0xff]
    %v308 = vld [vmem:[#allocation6 + $0x740] sm:$0xff]
    %v309 = vld [vmem:[#allocation6 + $0x748] sm:$0xff]
    %v310 = vld [vmem:[#allocation6 + $0x750] sm:$0xff]
    %v311 = vld [vmem:[#allocation6 + $0x758] sm:$0xff]
    %v312 = vld [vmem:[#allocation6 + $0x760] sm:$0xff]
    %v313 = vld [vmem:[#allocation6 + $0x768] sm:$0xff]
    %v314 = vld [vmem:[#allocation6 + $0x770] sm:$0xff]
    %v315 = vld [vmem:[#allocation6 + $0x778] sm:$0xff]
    %v316 = vld [vmem:[#allocation6 + $0x780] sm:$0xff]
    %v317 = vld [vmem:[#allocation6 + $0x788] sm:$0xff]
    %v318 = vld [vmem:[#allocation6 + $0x790] sm:$0xff]
    %v319 = vld [vmem:[#allocation6 + $0x798] sm:$0xff]
    %v320 = vld [vmem:[#allocation6 + $0x7a0] sm:$0xff]
    %v321 = vld [vmem:[#allocation6 + $0x7a8] sm:$0xff]
    %v322 = vld [vmem:[#allocation6 + $0x7b0] sm:$0xff]
    %v323 = vld [vmem:[#allocation6 + $0x7b8] sm:$0xff]
    %v324 = vld [vmem:[#allocation6 + $0x7c0] sm:$0xff]
    %v325 = vld [vmem:[#allocation6 + $0x7c8] sm:$0xff]
    %v326 = vld [vmem:[#allocation6 + $0x7d0] sm:$0xff]
    %v327 = vld [vmem:[#allocation6 + $0x7d8] sm:$0xff]
    %v328 = vld [vmem:[#allocation6 + $0x7e0] sm:$0xff]
    %v329 = vld [vmem:[#allocation6 + $0x7e8] sm:$0xff]
    %v330 = vld [vmem:[#allocation6 + $0x7f0] sm:$0xff]
    %v331 = vld [vmem:[#allocation6 + $0x7f8] sm:$0xff]
    %332 = vmatprep.subr.mxu0 %v77
    %333 = vmatpush1.msra.mxu0 %v76
    %334 = vmatprep.subr.mxu0 %v79
    %335 = vmatpush1.msra.mxu0 %v78
    %336 = vmatprep.subr.mxu0 %v81
    %337 = vmatpush1.msra.mxu0 %v80
    %338 = vmatprep.subr.mxu0 %v83
    %339 = vmatpush1.msra.mxu0 %v82
    %340 = vmatprep.subr.mxu0 %v85
    %341 = vmatpush1.msra.mxu0 %v84
    %342 = vmatprep.subr.mxu0 %v87
    %343 = vmatpush1.msra.mxu0 %v86
    %344 = vmatprep.subr.mxu0 %v89
    %345 = vmatpush1.msra.mxu0 %v88
    %346 = vmatprep.subr.mxu0 %v91
    %347 = vmatpush1.msra.mxu0 %v90
    %348 = vmatprep.subr.mxu0 %v93
    %349 = vmatpush1.msra.mxu0 %v92
    %350 = vmatprep.subr.mxu0 %v95
    %351 = vmatpush1.msra.mxu0 %v94
    %352 = vmatprep.subr.mxu0 %v97
    %353 = vmatpush1.msra.mxu0 %v96
    %354 = vmatprep.subr.mxu0 %v99
    %355 = vmatpush1.msra.mxu0 %v98
    %356 = vmatprep.subr.mxu0 %v101
    %357 = vmatpush1.msra.mxu0 %v100
    %358 = vmatprep.subr.mxu0 %v103
    %359 = vmatpush1.msra.mxu0 %v102
    %360 = vmatprep.subr.mxu0 %v105
    %361 = vmatpush1.msra.mxu0 %v104
    %362 = vmatprep.subr.mxu0 %v107
    %363 = vmatpush1.msra.mxu0 %v106
    %364 = vmatprep.subr.mxu0 %v109
    %365 = vmatpush1.msra.mxu0 %v108
    %366 = vmatprep.subr.mxu0 %v111
    %367 = vmatpush1.msra.mxu0 %v110
    %368 = vmatprep.subr.mxu0 %v113
    %369 = vmatpush1.msra.mxu0 %v112
    %370 = vmatprep.subr.mxu0 %v115
    %371 = vmatpush1.msra.mxu0 %v114
    %372 = vmatprep.subr.mxu0 %v117
    %373 = vmatpush1.msra.mxu0 %v116
    %374 = vmatprep.subr.mxu0 %v119
    %375 = vmatpush1.msra.mxu0 %v118
    %376 = vmatprep.subr.mxu0 %v121
    %377 = vmatpush1.msra.mxu0 %v120
    %378 = vmatprep.subr.mxu0 %v123
    %379 = vmatpush1.msra.mxu0 %v122
    %380 = vmatprep.subr.mxu0 %v125
    %381 = vmatpush1.msra.mxu0 %v124
    %382 = vmatprep.subr.mxu0 %v127
    %383 = vmatpush1.msra.mxu0 %v126
    %384 = vmatprep.subr.mxu0 %v129
    %385 = vmatpush1.msra.mxu0 %v128
    %386 = vmatprep.subr.mxu0 %v131
    %387 = vmatpush1.msra.mxu0 %v130
    %388 = vmatprep.subr.mxu0 %v133
    %389 = vmatpush1.msra.mxu0 %v132
    %390 = vmatprep.subr.mxu0 %v135
    %391 = vmatpush1.msra.mxu0 %v134
    %392 = vmatprep.subr.mxu0 %v137
    %393 = vmatpush1.msra.mxu0 %v136
    %394 = vmatprep.subr.mxu0 %v139
    %395 = vmatpush1.msra.mxu0 %v138
    %396 = vmatprep.mubr.f32.mxu0 %v69
    %397 = vmatmul.mubr.f32.gmra.mrb[0].mxu0 %v68
    %v398 = vpop.f32.mrb[0].mxu0
    %v399 = vadd.f32 0.0, %v398
    %v400 = vpop.f32.mrb[0].mxu0
    %v401 = vadd.f32 0.0, %v400
    %402 = vdwg.mxu0
    %403 = vmatprep.subr.mxu0 %v141
    %404 = vmatpush1.msra.mxu0 %v140
    %405 = vmatprep.subr.mxu0 %v143
    %406 = vmatpush1.msra.mxu0 %v142
    %407 = vmatprep.subr.mxu0 %v145
    %408 = vmatpush1.msra.mxu0 %v144
    %409 = vmatprep.subr.mxu0 %v147
    %410 = vmatpush1.msra.mxu0 %v146
    %411 = vmatprep.subr.mxu0 %v149
    %412 = vmatpush1.msra.mxu0 %v148
    %413 = vmatprep.subr.mxu0 %v151
    %414 = vmatpush1.msra.mxu0 %v150
    %415 = vmatprep.subr.mxu0 %v153
    %416 = vmatpush1.msra.mxu0 %v152
    %417 = vmatprep.subr.mxu0 %v155
    %418 = vmatpush1.msra.mxu0 %v154
    %419 = vmatprep.subr.mxu0 %v157
    %420 = vmatpush1.msra.mxu0 %v156
    %421 = vmatprep.subr.mxu0 %v159
    %422 = vmatpush1.msra.mxu0 %v158
    %423 = vmatprep.subr.mxu0 %v161
    %424 = vmatpush1.msra.mxu0 %v160
    %425 = vmatprep.subr.mxu0 %v163
    %426 = vmatpush1.msra.mxu0 %v162
    %427 = vmatprep.subr.mxu0 %v165
    %428 = vmatpush1.msra.mxu0 %v164
    %429 = vmatprep.subr.mxu0 %v167
    %430 = vmatpush1.msra.mxu0 %v166
    %431 = vmatprep.subr.mxu0 %v169
    %432 = vmatpush1.msra.mxu0 %v168
    %433 = vmatprep.subr.mxu0 %v171
    %434 = vmatpush1.msra.mxu0 %v170
    %435 = vmatprep.subr.mxu0 %v173
    %436 = vmatpush1.msra.mxu0 %v172
    %437 = vmatprep.subr.mxu0 %v175
    %438 = vmatpush1.msra.mxu0 %v174
    %439 = vmatprep.subr.mxu0 %v177
    %440 = vmatpush1.msra.mxu0 %v176
    %441 = vmatprep.subr.mxu0 %v179
    %442 = vmatpush1.msra.mxu0 %v178
    %443 = vmatprep.subr.mxu0 %v181
    %444 = vmatpush1.msra.mxu0 %v180
    %445 = vmatprep.subr.mxu0 %v183
    %446 = vmatpush1.msra.mxu0 %v182
    %447 = vmatprep.subr.mxu0 %v185
    %448 = vmatpush1.msra.mxu0 %v184
    %449 = vmatprep.subr.mxu0 %v187
    %450 = vmatpush1.msra.mxu0 %v186
    %451 = vmatprep.subr.mxu0 %v189
    %452 = vmatpush1.msra.mxu0 %v188
    %453 = vmatprep.subr.mxu0 %v191
    %454 = vmatpush1.msra.mxu0 %v190
    %455 = vmatprep.subr.mxu0 %v193
    %456 = vmatpush1.msra.mxu0 %v192
    %457 = vmatprep.subr.mxu0 %v195
    %458 = vmatpush1.msra.mxu0 %v194
    %459 = vmatprep.subr.mxu0 %v197
    %460 = vmatpush1.msra.mxu0 %v196
    %461 = vmatprep.subr.mxu0 %v199
    %462 = vmatpush1.msra.mxu0 %v198
    %463 = vmatprep.subr.mxu0 %v201
    %464 = vmatpush1.msra.mxu0 %v200
    %465 = vmatprep.subr.mxu0 %v203
    %466 = vmatpush1.msra.mxu0 %v202
    %467 = vmatprep.mubr.f32.mxu0 %v71
    %468 = vmatmul.mubr.f32.gmra.mrb[0].mxu0 %v70
    %v469 = vpop.f32.mrb[0].mxu0
    %v470 = vadd.f32 %v399, %v469
    %v471 = vpop.f32.mrb[0].mxu0
    %v472 = vadd.f32 %v401, %v471
    %473 = vdwg.mxu0
    %474 = vmatprep.subr.mxu0 %v205
    %475 = vmatpush1.msra.mxu0 %v204
    %476 = vmatprep.subr.mxu0 %v207
    %477 = vmatpush1.msra.mxu0 %v206
    %478 = vmatprep.subr.mxu0 %v209
    %479 = vmatpush1.msra.mxu0 %v208
    %480 = vmatprep.subr.mxu0 %v211
    %481 = vmatpush1.msra.mxu0 %v210
    %482 = vmatprep.subr.mxu0 %v213
    %483 = vmatpush1.msra.mxu0 %v212
    %484 = vmatprep.subr.mxu0 %v215
    %485 = vmatpush1.msra.mxu0 %v214
    %486 = vmatprep.subr.mxu0 %v217
    %487 = vmatpush1.msra.mxu0 %v216
    %488 = vmatprep.subr.mxu0 %v219
    %489 = vmatpush1.msra.mxu0 %v218
    %490 = vmatprep.subr.mxu0 %v221
    %491 = vmatpush1.msra.mxu0 %v220
    %492 = vmatprep.subr.mxu0 %v223
    %493 = vmatpush1.msra.mxu0 %v222
    %494 = vmatprep.subr.mxu0 %v225
    %495 = vmatpush1.msra.mxu0 %v224
    %496 = vmatprep.subr.mxu0 %v227
    %497 = vmatpush1.msra.mxu0 %v226
    %498 = vmatprep.subr.mxu0 %v229
    %499 = vmatpush1.msra.mxu0 %v228
    %500 = vmatprep.subr.mxu0 %v231
    %501 = vmatpush1.msra.mxu0 %v230
    %502 = vmatprep.subr.mxu0 %v233
    %503 = vmatpush1.msra.mxu0 %v232
    %504 = vmatprep.subr.mxu0 %v235
    %505 = vmatpush1.msra.mxu0 %v234
    %506 = vmatprep.subr.mxu0 %v237
    %507 = vmatpush1.msra.mxu0 %v236
    %508 = vmatprep.subr.mxu0 %v239
    %509 = vmatpush1.msra.mxu0 %v238
    %510 = vmatprep.subr.mxu0 %v241
    %511 = vmatpush1.msra.mxu0 %v240
    %512 = vmatprep.subr.mxu0 %v243
    %513 = vmatpush1.msra.mxu0 %v242
    %514 = vmatprep.subr.mxu0 %v245
    %515 = vmatpush1.msra.mxu0 %v244
    %516 = vmatprep.subr.mxu0 %v247
    %517 = vmatpush1.msra.mxu0 %v246
    %518 = vmatprep.subr.mxu0 %v249
    %519 = vmatpush1.msra.mxu0 %v248
    %520 = vmatprep.subr.mxu0 %v251
    %521 = vmatpush1.msra.mxu0 %v250
    %522 = vmatprep.subr.mxu0 %v253
    %523 = vmatpush1.msra.mxu0 %v252
    %524 = vmatprep.subr.mxu0 %v255
    %525 = vmatpush1.msra.mxu0 %v254
    %526 = vmatprep.subr.mxu0 %v257
    %527 = vmatpush1.msra.mxu0 %v256
    %528 = vmatprep.subr.mxu0 %v259
    %529 = vmatpush1.msra.mxu0 %v258
    %530 = vmatprep.subr.mxu0 %v261
    %531 = vmatpush1.msra.mxu0 %v260
    %532 = vmatprep.subr.mxu0 %v263
    %533 = vmatpush1.msra.mxu0 %v262
    %534 = vmatprep.subr.mxu0 %v265
    %535 = vmatpush1.msra.mxu0 %v264
    %536 = vmatprep.subr.mxu0 %v267
    %537 = vmatpush1.msra.mxu0 %v266
    %538 = vmatprep.mubr.f32.mxu0 %v73
    %539 = vmatmul.mubr.f32.gmra.mrb[0].mxu0 %v72
    %v540 = vpop.f32.mrb[0].mxu0
    %v541 = vadd.f32 %v470, %v540
    %v542 = vpop.f32.mrb[0].mxu0
    %v543 = vadd.f32 %v472, %v542
    %544 = vdwg.mxu0
    %545 = vmatprep.subr.mxu0 %v269
    %546 = vmatpush1.msra.mxu0 %v268
    %547 = vmatprep.subr.mxu0 %v271
    %548 = vmatpush1.msra.mxu0 %v270
    %549 = vmatprep.subr.mxu0 %v273
    %550 = vmatpush1.msra.mxu0 %v272
    %551 = vmatprep.subr.mxu0 %v275
    %552 = vmatpush1.msra.mxu0 %v274
    %553 = vmatprep.subr.mxu0 %v277
    %554 = vmatpush1.msra.mxu0 %v276
    %555 = vmatprep.subr.mxu0 %v279
    %556 = vmatpush1.msra.mxu0 %v278
    %557 = vmatprep.subr.mxu0 %v281
    %558 = vmatpush1.msra.mxu0 %v280
    %559 = vmatprep.subr.mxu0 %v283
    %560 = vmatpush1.msra.mxu0 %v282
    %561 = vmatprep.subr.mxu0 %v285
    %562 = vmatpush1.msra.mxu0 %v284
    %563 = vmatprep.subr.mxu0 %v287
    %564 = vmatpush1.msra.mxu0 %v286
    %565 = vmatprep.subr.mxu0 %v289
    %566 = vmatpush1.msra.mxu0 %v288
    %567 = vmatprep.subr.mxu0 %v291
    %568 = vmatpush1.msra.mxu0 %v290
    %569 = vmatprep.subr.mxu0 %v293
    %570 = vmatpush1.msra.mxu0 %v292
    %571 = vmatprep.subr.mxu0 %v295
    %572 = vmatpush1.msra.mxu0 %v294
    %573 = vmatprep.subr.mxu0 %v297
    %574 = vmatpush1.msra.mxu0 %v296
    %575 = vmatprep.subr.mxu0 %v299
    %576 = vmatpush1.msra.mxu0 %v298
    %577 = vmatprep.subr.mxu0 %v301
    %578 = vmatpush1.msra.mxu0 %v300
    %579 = vmatprep.subr.mxu0 %v303
    %580 = vmatpush1.msra.mxu0 %v302
    %581 = vmatprep.subr.mxu0 %v305
    %582 = vmatpush1.msra.mxu0 %v304
    %583 = vmatprep.subr.mxu0 %v307
    %584 = vmatpush1.msra.mxu0 %v306
    %585 = vmatprep.subr.mxu0 %v309
    %586 = vmatpush1.msra.mxu0 %v308
    %587 = vmatprep.subr.mxu0 %v311
    %588 = vmatpush1.msra.mxu0 %v310
    %589 = vmatprep.subr.mxu0 %v313
    %590 = vmatpush1.msra.mxu0 %v312
    %591 = vmatprep.subr.mxu0 %v315
    %592 = vmatpush1.msra.mxu0 %v314
    %593 = vmatprep.subr.mxu0 %v317
    %594 = vmatpush1.msra.mxu0 %v316
    %595 = vmatprep.subr.mxu0 %v319
    %596 = vmatpush1.msra.mxu0 %v318
    %597 = vmatprep.subr.mxu0 %v321
    %598 = vmatpush1.msra.mxu0 %v320
    %599 = vmatprep.subr.mxu0 %v323
    %600 = vmatpush1.msra.mxu0 %v322
    %601 = vmatprep.subr.mxu0 %v325
    %602 = vmatpush1.msra.mxu0 %v324
    %603 = vmatprep.subr.mxu0 %v327
    %604 = vmatpush1.msra.mxu0 %v326
    %605 = vmatprep.subr.mxu0 %v329
    %606 = vmatpush1.msra.mxu0 %v328
    %607 = vmatprep.subr.mxu0 %v331
    %608 = vmatpush1.msra.mxu0 %v330
    %609 = vmatprep.mubr.f32.mxu0 %v75
    %610 = vmatmul.mubr.f32.gmra.mrb[0].mxu0 %v74
    %v611 = vpop.f32.mrb[0].mxu0
    %v612 = vadd.f32 %v541, %v611
    %v613 = vpop.f32.mrb[0].mxu0
    %v614 = vadd.f32 %v543, %v613
    %615 = vdwg.mxu0
    %v616 = vadd.f32 %v66, %v612
    %v617 = vadd.f32 %v67, %v614
    %618 = vst [vmem:[#allocation2] sm:$0xff] %v616
    %619 = vst [vmem:[#allocation2 + $0x8] sm:$0xff] %v617
    // Predicated region
    $region38: #{tpu_custom_call.1} parent=1 // pred_check
      %p620 = pneg %p60
    $region39: #{tpu_custom_call.1} parent=1 // pred_check_branch
      %622 = sbr.rel (%p620) target = $region41
    $region40: #{tpu_custom_call.1} parent=1 // pred_region
      %v623 = vld [vmem:[#allocation2] sm:$0xff]
      %v624 = vld [vmem:[#allocation2 + $0x8] sm:$0xff]
      %v625 = vld [vmem:[%s2] sm:$0x3]
      %v627 = vlaneseq
      %v628 = vshrl.u32 %v627, 7
      %v629 = vsub.s32 0, %v628
      %v630 = vrot.slane %v625, %v629
      %v631 = vlaneseq
      %v632 = vshrl.u32 %v631, 7
      %v633 = vsub.s32 1, %v632
      %v634 = vrot.slane %v625, %v633
      %v637 = vadd.f32 %v623, %v630
      %v638 = vadd.f32 %v624, %v634
      %v639 = vmax.f32 %v637, 0.0
      %v640 = vmax.f32 %v638, 0.0
      %v641 = vld [vmem:[#allocation8] sm:$0xff]
      %v642 = vld [vmem:[#allocation8 + $0x8] sm:$0xff]
      %v643 = vld [vmem:[#allocation8 + $0x10] sm:$0xff]
      %v644 = vld [vmem:[#allocation8 + $0x18] sm:$0xff]
      %v645 = vld [vmem:[#allocation8 + $0x20] sm:$0xff]
      %v646 = vld [vmem:[#allocation8 + $0x28] sm:$0xff]
      %v647 = vld [vmem:[#allocation8 + $0x30] sm:$0xff]
      %v648 = vld [vmem:[#allocation8 + $0x38] sm:$0xff]
      %v649 = vld [vmem:[#allocation8 + $0x40] sm:$0xff]
      %v650 = vld [vmem:[#allocation8 + $0x48] sm:$0xff]
      %v651 = vld [vmem:[#allocation8 + $0x50] sm:$0xff]
      %v652 = vld [vmem:[#allocation8 + $0x58] sm:$0xff]
      %v653 = vld [vmem:[#allocation8 + $0x60] sm:$0xff]
      %v654 = vld [vmem:[#allocation8 + $0x68] sm:$0xff]
      %v655 = vld [vmem:[#allocation8 + $0x70] sm:$0xff]
      %v656 = vld [vmem:[#allocation8 + $0x78] sm:$0xff]
      %v657 = vld [vmem:[#allocation8 + $0x80] sm:$0xff]
      %v658 = vld [vmem:[#allocation8 + $0x88] sm:$0xff]
      %v659 = vld [vmem:[#allocation8 + $0x90] sm:$0xff]
      %v660 = vld [vmem:[#allocation8 + $0x98] sm:$0xff]
      %v661 = vld [vmem:[#allocation8 + $0xa0] sm:$0xff]
      %v662 = vld [vmem:[#allocation8 + $0xa8] sm:$0xff]
      %v663 = vld [vmem:[#allocation8 + $0xb0] sm:$0xff]
      %v664 = vld [vmem:[#allocation8 + $0xb8] sm:$0xff]
      %v665 = vld [vmem:[#allocation8 + $0xc0] sm:$0xff]
      %v666 = vld [vmem:[#allocation8 + $0xc8] sm:$0xff]
      %v667 = vld [vmem:[#allocation8 + $0xd0] sm:$0xff]
      %v668 = vld [vmem:[#allocation8 + $0xd8] sm:$0xff]
      %v669 = vld [vmem:[#allocation8 + $0xe0] sm:$0xff]
      %v670 = vld [vmem:[#allocation8 + $0xe8] sm:$0xff]
      %v671 = vld [vmem:[#allocation8 + $0xf0] sm:$0xff]
      %v672 = vld [vmem:[#allocation8 + $0xf8] sm:$0xff]
      %v673 = vld [vmem:[%s4] sm:$0x1]
      %v675 = vlaneseq
      %v676 = vshrl.u32 %v675, 7
      %v677 = vsub.s32 0, %v676
      %v678 = vrot.slane %v673, %v677
      %680 = vmatprep.subr.mxu0 0.0
      %681 = vmatpush1.msra.mxu0 %v641
      %682 = vmatprep.subr.mxu0 0.0
      %683 = vmatpush1.msra.mxu0 %v642
      %684 = vmatprep.subr.mxu0 0.0
      %685 = vmatpush1.msra.mxu0 %v643
      %686 = vmatprep.subr.mxu0 0.0
      %687 = vmatpush1.msra.mxu0 %v644
      %688 = vmatprep.subr.mxu0 0.0
      %689 = vmatpush1.msra.mxu0 %v645
      %690 = vmatprep.subr.mxu0 0.0
      %691 = vmatpush1.msra.mxu0 %v646
      %692 = vmatprep.subr.mxu0 0.0
      %693 = vmatpush1.msra.mxu0 %v647
      %694 = vmatprep.subr.mxu0 0.0
      %695 = vmatpush1.msra.mxu0 %v648
      %696 = vmatprep.subr.mxu0 0.0
      %697 = vmatpush1.msra.mxu0 %v649
      %698 = vmatprep.subr.mxu0 0.0
      %699 = vmatpush1.msra.mxu0 %v650
      %700 = vmatprep.subr.mxu0 0.0
      %701 = vmatpush1.msra.mxu0 %v651
      %702 = vmatprep.subr.mxu0 0.0
      %703 = vmatpush1.msra.mxu0 %v652
      %704 = vmatprep.subr.mxu0 0.0
      %705 = vmatpush1.msra.mxu0 %v653
      %706 = vmatprep.subr.mxu0 0.0
      %707 = vmatpush1.msra.mxu0 %v654
      %708 = vmatprep.subr.mxu0 0.0
      %709 = vmatpush1.msra.mxu0 %v655
      %710 = vmatprep.subr.mxu0 0.0
      %711 = vmatpush1.msra.mxu0 %v656
      %712 = vmatprep.subr.mxu0 0.0
      %713 = vmatpush1.msra.mxu0 %v657
      %714 = vmatprep.subr.mxu0 0.0
      %715 = vmatpush1.msra.mxu0 %v658
      %716 = vmatprep.subr.mxu0 0.0
      %717 = vmatpush1.msra.mxu0 %v659
      %718 = vmatprep.subr.mxu0 0.0
      %719 = vmatpush1.msra.mxu0 %v660
      %720 = vmatprep.subr.mxu0 0.0
      %721 = vmatpush1.msra.mxu0 %v661
      %722 = vmatprep.subr.mxu0 0.0
      %723 = vmatpush1.msra.mxu0 %v662
      %724 = vmatprep.subr.mxu0 0.0
      %725 = vmatpush1.msra.mxu0 %v663
      %726 = vmatprep.subr.mxu0 0.0
      %727 = vmatpush1.msra.mxu0 %v664
      %728 = vmatprep.subr.mxu0 0.0
      %729 = vmatpush1.msra.mxu0 %v665
      %730 = vmatprep.subr.mxu0 0.0
      %731 = vmatpush1.msra.mxu0 %v666
      %732 = vmatprep.subr.mxu0 0.0
      %733 = vmatpush1.msra.mxu0 %v667
      %734 = vmatprep.subr.mxu0 0.0
      %735 = vmatpush1.msra.mxu0 %v668
      %736 = vmatprep.subr.mxu0 0.0
      %737 = vmatpush1.msra.mxu0 %v669
      %738 = vmatprep.subr.mxu0 0.0
      %739 = vmatpush1.msra.mxu0 %v670
      %740 = vmatprep.subr.mxu0 0.0
      %741 = vmatpush1.msra.mxu0 %v671
      %742 = vmatprep.subr.mxu0 0.0
      %743 = vmatpush1.msra.mxu0 %v672
      %744 = vmatprep.mubr.f32.mxu0 %v640
      %745 = vmatmul.mubr.f32.gmra.mrb[0].mxu0 %v639
      %v746 = vpop.f32.mrb[0].mxu0
      %v747 = vadd.f32 %v678, %v746
      %v748 = vpop.f32.mrb[0].mxu0
      %749 = vdwg.mxu0
      %v750 = vmul.f32 %v747, %v747
      %751 = vadd.xlane.f32.xlu0 %v750
      %v752 = vpop.xlane.xlu0 %751
      %v753 = vrsqrt.pop %v752
      %v754 = vmul.f32 %v747, %v753
      %755 = vst [vmem:[#allocation9] sm:$0xff] %v754
    $region41: #{tpu_custom_call.1} parent=1 // pred_fallthru
      _
    // Predicated region
    $region42: #{tpu_custom_call.1} parent=1 // pred_check
      _
    $region43: #{tpu_custom_call.1} parent=1 // pred_check_branch
      %757 = sbr.rel (0) target = $region45
    $region44: #{tpu_custom_call.1} parent=1 // pred_region
      %s759 = ssub.s32 128, 128
      %760 = vsyncadd [#allocation5], %s759
      %s762 = sshll.u32 [#allocation9], 4
      %s763 = int_to_ptr.vmem [resolvable:$true] %s762
      %765 = dma.vmem_to_hbm [thread:$0]  %s763, 128, %s5, [#allocation5]
    $region45: #{tpu_custom_call.1} parent=1 // pred_fallthru
      _
    // Predicated region
    $region46: #{tpu_custom_call.1} parent=1 // pred_check
      _
    $region47: #{tpu_custom_call.1} parent=1 // pred_check_branch
      %767 = sbr.rel (0) target = $region49
    $region48: #{tpu_custom_call.1} parent=1 // pred_region
      %768 = dma.done [#allocation5], 128
    $region49: #{tpu_custom_call.1} parent=1 // pred_fallthru
      _
    %769 = vsyncpa [#allocation4], 1
    %770 = vsyncpa [#allocation7], 1
    %771 = vsyncpa [#allocation5], 1

</llo_original>
